<compile_context>
chip_gen: v5e
topology: v5e:2x2
jax: 0.10.0
libtpu: 0.0.40
codegen_flags: <defaults>
</compile_context>

<pallas_src>
import functools

import jax
import jax.numpy as jnp
from jax import lax
from jax.experimental import pallas as pl
from jax.experimental.pallas import tpu as pltpu

NEG_SLOPE = 0.2          # LeakyReLU slope assumed for ConvBlock


def _round_up(x, m):
    return ((x + m - 1) // m) * m


def _pad2(x, rows, cols):
    r, c = x.shape
    if r == rows and c == cols:
        return x
    return jnp.pad(x, ((0, rows - r), (0, cols - c)))


def _default_vmem_limit():
    # ~75% of physical VMEM, capped at 96 MiB: 96 MiB on v5e/v6e (128 MiB
    # physical), 48 MiB on v7x (64 MiB physical) -> headroom for double
    # buffering on every generation.
    try:
        cap = pltpu.get_tpu_info().vmem_capacity_bytes
    except Exception:
        cap = 128 * 1024 * 1024
    return int(min(96 * 1024 * 1024, (cap * 3) // 4))


VMEM_LIMIT = _default_vmem_limit()


# ----------------------------- Pallas kernels ------------------------------ #

def _mm_bias_act_kernel(a_ref, w_ref, b_ref, o_ref, acc_ref, *, apply_act):
    """Tiled GEMM: bf16 tiles on the MXU, f32 accumulator, bias+act epilogue."""
    k = pl.program_id(2)
    prod = jnp.dot(a_ref[...], w_ref[...], preferred_element_type=jnp.float32)

    # First K step writes the partial product (no full-tile zero store).
    @pl.when(k == 0)
    def _():
        acc_ref[...] = prod

    @pl.when(k > 0)
    def _():
        acc_ref[...] += prod

    @pl.when(k == pl.num_programs(2) - 1)
    def _():
        out = acc_ref[...] + b_ref[...]                 # bias added once, f32
        if apply_act:
            out = jnp.maximum(out, NEG_SLOPE * out)     # LeakyReLU via vmax
        o_ref[...] = out.astype(o_ref.dtype)            # bf16 (or f32) store


def matmul_bias(a, w, b, *, act, out_dtype=jnp.bfloat16,
                tm=256, tn=256, max_tk=2048):
    """(M,K) @ (K,N) + bias(N), optional LeakyReLU, out in `out_dtype`.

    Pads M/K/N to (8,128)-aligned tile multiples (zero-padding K is exact),
    casts A/W to bf16, and runs a pipelined 3-D grid with an f32 VMEM
    accumulator.  K tiles are as large as possible (<= max_tk) so most layers
    reduce in 1-3 grid steps; the output last dim is always a lane-dense
    multiple of 128 inside the kernel (sliced in the wrapper).
    """
    M, K = a.shape
    K2, N = w.shape
    assert K == K2
    tm = min(tm, _round_up(M, 8))
    tn = min(tn, _round_up(N, 128))
    Mp, Np = _round_up(M, tm), _round_up(N, tn)
    # Keep >=2 parallel output blocks so a second TensorCore (v7x) gets work.
    if (Mp // tm) * (Np // tn) < 2 and tn > 128:
        tn //= 2
        Np = _round_up(N, tn)
    # Few, large K steps with minimal zero padding.
    Kp0 = _round_up(K, 128)
    nk = pl.cdiv(Kp0, max_tk)
    tk = _round_up(pl.cdiv(Kp0, nk), 128)
    Kp = nk * tk

    a_p = _pad2(a.astype(jnp.bfloat16), Mp, Kp)
    w_p = _pad2(w.astype(jnp.bfloat16), Kp, Np)
    b_p = _pad2(b.reshape(1, N).astype(jnp.float32), 1, Np)

    grid = (Mp // tm, Np // tn, nk)
    out = pl.pallas_call(
        functools.partial(_mm_bias_act_kernel, apply_act=act),
        out_shape=jax.ShapeDtypeStruct((Mp, Np), out_dtype),
        grid=grid,
        in_specs=[
            pl.BlockSpec((tm, tk), lambda i, j, k: (i, k)),
            pl.BlockSpec((tk, tn), lambda i, j, k: (k, j)),
            pl.BlockSpec((1, tn), lambda i, j, k: (0, j)),   # bias: N-index only
        ],
        out_specs=pl.BlockSpec((tm, tn), lambda i, j, k: (i, j)),
        scratch_shapes=[pltpu.VMEM((tm, tn), jnp.float32)],
        compiler_params=pltpu.CompilerParams(
            dimension_semantics=("parallel", "parallel", "arbitrary"),
            vmem_limit_bytes=VMEM_LIMIT),
    )(a_p, w_p, b_p)
    return out[:M, :N]


def _flash_attn_kernel(gamma_ref, q_ref, k_ref, v_ref, x_ref, o_ref,
                       m_ref, l_ref, acc_ref, *, kv_len, tkv):
    """Online-softmax attention over KV tiles + gamma residual epilogue."""
    kv_i = pl.program_id(2)

    @pl.when(kv_i == 0)
    def _():
        m_ref[...] = jnp.full_like(m_ref, -1e30)
        l_ref[...] = jnp.zeros_like(l_ref)
        acc_ref[...] = jnp.zeros_like(acc_ref)

    q = q_ref[0]                      # (tq, dqk)  bf16
    k = k_ref[0]                      # (tkv, dqk) bf16
    v = v_ref[0]                      # (tkv, C)   bf16
    # trans-B contraction directly on the MXU (no explicit k.T relayout).
    s = lax.dot_general(q, k, (((1,), (1,)), ((), ())),
                        preferred_element_type=jnp.float32)   # (tq, tkv) f32
    col = kv_i * tkv + lax.broadcasted_iota(jnp.int32, s.shape, 1)
    s = jnp.where(col < kv_len, s, -1e30)                     # mask padded KV

    m_prev = m_ref[0]                                          # (tq, 1)
    m_new = jnp.maximum(m_prev, jnp.max(s, axis=-1, keepdims=True))
    alpha = jnp.exp(m_prev - m_new)
    p = jnp.exp(s - m_new)
    l_ref[0] = alpha * l_ref[0] + jnp.sum(p, axis=-1, keepdims=True)
    acc_ref[0] = alpha * acc_ref[0] + jnp.dot(
        p.astype(jnp.bfloat16), v, preferred_element_type=jnp.float32)
    m_ref[0] = m_new

    @pl.when(kv_i == pl.num_programs(2) - 1)
    def _():
        inv = pl.reciprocal(l_ref[0], approx=True)
        out = gamma_ref[0] * (acc_ref[0] * inv) + x_ref[0].astype(jnp.float32)
        o_ref[0] = out.astype(o_ref.dtype)


def self_attention(gamma, q, k, v, x, *, out_dtype=jnp.bfloat16,
                   tq=256, tkv=512):
    """SAGAN attention, flash-tiled.

    q,k: (B,P,c8) bf16 (unpadded head dim); v,x: (B,P,C) bf16; gamma: (1,) f32.
    Grid = (B, query tiles, KV tiles): B/query axes are parallel (megacore),
    KV is the reduction axis with online max/sum scratch, so the (P,P) energy
    matrix is never materialized.
    """
    B, P, dqk = q.shape
    C = v.shape[-1]
    tq = min(tq, _round_up(P, 8))
    tkv = min(tkv, _round_up(P, 8))
    Pq, Pk = _round_up(P, tq), _round_up(P, tkv)

    def pad_p(a, pp):
        if a.shape[1] == pp:
            return a
        return jnp.pad(a, ((0, 0), (0, pp - a.shape[1]), (0, 0)))

    qp, xp = pad_p(q, Pq), pad_p(x, Pq)
    kp, vp = pad_p(k, Pk), pad_p(v, Pk)

    out = pl.pallas_call(
        functools.partial(_flash_attn_kernel, kv_len=P, tkv=tkv),
        out_shape=jax.ShapeDtypeStruct((B, Pq, C), out_dtype),
        grid=(B, Pq // tq, Pk // tkv),
        in_specs=[
            pl.BlockSpec(memory_space=pltpu.MemorySpace.SMEM),       # gamma (1,)
            pl.BlockSpec((1, tq, dqk), lambda b, qi, ki: (b, qi, 0)),
            pl.BlockSpec((1, tkv, dqk), lambda b, qi, ki: (b, ki, 0)),
            pl.BlockSpec((1, tkv, C), lambda b, qi, ki: (b, ki, 0)),
            pl.BlockSpec((1, tq, C), lambda b, qi, ki: (b, qi, 0)),
        ],
        out_specs=pl.BlockSpec((1, tq, C), lambda b, qi, ki: (b, qi, 0)),
        scratch_shapes=[pltpu.VMEM((1, tq, 1), jnp.float32),
                        pltpu.VMEM((1, tq, 1), jnp.float32),
                        pltpu.VMEM((1, tq, C), jnp.float32)],
        compiler_params=pltpu.CompilerParams(
            dimension_semantics=("parallel", "parallel", "arbitrary"),
            vmem_limit_bytes=VMEM_LIMIT),
    )(gamma, qp, kp, vp, xp)
    return out[:, :P, :]


# ------------------------------ JAX glue ----------------------------------- #

def im2col(x, kh, kw, stride, pad):
    """NHWC input -> (N*Ho*Wo, kh*kw*C) patch matrix (bf16)."""
    N, H, W, C = x.shape
    xp = jnp.pad(x, ((0, 0), (pad, pad), (pad, pad), (0, 0)))
    Ho = (H + 2 * pad - kh) // stride + 1
    Wo = (W + 2 * pad - kw) // stride + 1
    patches = []
    for i in range(kh):
        for j in range(kw):
            patches.append(xp[:, i:i + stride * Ho:stride,
                              j:j + stride * Wo:stride, :])
    cols = jnp.stack(patches, axis=-2)               # (N, Ho, Wo, kh*kw, C)
    return cols.reshape(N * Ho * Wo, kh * kw * C), (N, Ho, Wo)


def conv_block(x, p, *, stride, act, out_dtype=jnp.bfloat16):
    """Conv2d(k=3, pad=1) [+ LeakyReLU] via im2col + tiled Pallas GEMM."""
    kh, kw, cin, cout = p["w"].shape
    cols, (N, Ho, Wo) = im2col(x.astype(jnp.bfloat16), kh, kw, stride, 1)
    wmat = p["w"].reshape(kh * kw * cin, cout)
    out = matmul_bias(cols, wmat, p["b"], act=act, out_dtype=out_dtype)
    # Dropout is identity at inference.
    return out.reshape(N, Ho, Wo, cout)


def conv_block_with_attention(x, p):
    y = conv_block(x, p, stride=1, act=True)          # conv + LeakyReLU, bf16
    N, H, W, C = y.shape
    P = H * W
    flat = y.reshape(N * P, C)
    # Fused unpadded Q|K|V projection: one GEMM reads the activation once and
    # emits bf16 directly (no f32 round trip, no 128-lane zero padding in HBM).
    qkv = matmul_bias(flat, p["wqkv"], p["bqkv"], act=False,
                      out_dtype=jnp.bfloat16)
    c8 = (p["wqkv"].shape[1] - C) // 2
    q = qkv[:, :c8].reshape(N, P, c8)
    k = qkv[:, c8:2 * c8].reshape(N, P, c8)
    v = qkv[:, 2 * c8:].reshape(N, P, C)
    out = self_attention(p["gamma"], q, k, v, y.reshape(N, P, C))
    return out.reshape(N, H, W, C)


# --------------------------- parameter init -------------------------------- #

def _conv_params(key, cin, cout, k=3):
    kw_, kb_ = jax.random.split(key)
    scale = (1.0 / (k * k * cin)) ** 0.5
    return {
        "w": scale * jax.random.normal(kw_, (k, k, cin, cout), jnp.float32),
        "b": scale * jax.random.normal(kb_, (cout,), jnp.float32),
    }


def _attn_params(key, cin, cout, k=3):
    keys = jax.random.split(key, 4)
    p = _conv_params(keys[0], cin, cout, k)
    c8 = max(cout // 8, 1)
    s = (1.0 / cout) ** 0.5
    wq = s * jax.random.normal(keys[1], (cout, c8), jnp.float32)
    wk = s * jax.random.normal(keys[2], (cout, c8), jnp.float32)
    wv = s * jax.random.normal(keys[3], (cout, cout), jnp.float32)
    p["wqkv"] = jnp.concatenate([wq, wk, wv], axis=1)   # (C, 2*c8 + C)
    p["bqkv"] = jnp.zeros((2 * c8 + cout,), jnp.float32)
    p["gamma"] = jnp.zeros((1,), jnp.float32)           # SAGAN init: gamma = 0
    return p


def init_params(key, in_channels=2, out_channels=1,
                channels=(64, 128, 256, 512)):
    keys = jax.random.split(key, 8)
    return {
        "first": _conv_params(keys[0], in_channels, channels[0]),
        "b0": _conv_params(keys[1], channels[0], channels[1]),      # i = 0
        "att1": _attn_params(keys[2], channels[1], channels[2]),    # i = 1
        "b1": _conv_params(keys[3], channels[2], channels[2]),
        "att2": _attn_params(keys[4], channels[2], channels[3]),    # i = 2
        "b2": _conv_params(keys[5], channels[3], channels[3]),
        "final": _conv_params(keys[6], channels[3], out_channels),
    }


# ------------------------------- forward ----------------------------------- #

def forward(params, x_nchw):
    x = jnp.transpose(x_nchw, (0, 2, 3, 1))                       # NCHW -> NHWC
    x = conv_block(x, params["first"], stride=2, act=True)        # first_conv
    x = conv_block(x, params["b0"], stride=2, act=True)
    x = conv_block_with_attention(x, params["att1"])
    x = conv_block(x, params["b1"], stride=2, act=True)
    x = conv_block_with_attention(x, params["att2"])
    x = conv_block(x, params["b2"], stride=2, act=True)
    x = conv_block(x, params["final"], stride=1, act=False,
                   out_dtype=jnp.float32)                         # final_conv
    return jnp.transpose(x, (0, 3, 1, 2))                         # NHWC -> NCHW


if __name__ == "__main__":
    key = jax.random.PRNGKey(0)
    k_in, k_param = jax.random.split(key)
    x = jax.random.normal(k_in, (2, 2, 16, 16), jnp.float32)      # NCHW
    params = init_params(k_param)
    # SAGAN gamma init is 0 (attention contributes nothing); override in the
    # self-test so the attention path is numerically exercised.
    params["att1"]["gamma"] = jnp.array([0.5], jnp.float32)
    params["att2"]["gamma"] = jnp.array([0.5], jnp.float32)
    out = forward(params, x)
    out = jax.block_until_ready(out)
    assert out.shape == (2, 1, 1, 1), out.shape
    assert jnp.all(jnp.isfinite(out))
    print("KERNEL_OK")
</pallas_src>

<mosaic_0001>
module attributes {stable_mosaic.version = 11 : i64} {
  func.func @_mm_bias_act_kernel(%arg0: i32, %arg1: i32, %arg2: i32, %arg3: memref<128x128xbf16, #tpu.memory_space<vmem>>, %arg4: memref<128x128xbf16, #tpu.memory_space<vmem>>, %arg5: memref<1x128xf32, #tpu.memory_space<vmem>>, %arg6: memref<128x128xbf16, #tpu.memory_space<vmem>>, %arg7: memref<128x128xf32, #tpu.memory_space<vmem>>) attributes {dimension_semantics = [#tpu.dimension_semantics<parallel>, #tpu.dimension_semantics<parallel>, #tpu.dimension_semantics<arbitrary>], iteration_bounds = array<i64: 1, 1, 1>, scalar_prefetch = 0 : i64, scratch_operands = 1 : i64, tpu.core_type = #tpu.core_type<tc>, window_params = [{transform_indices = @transform_0, window_bounds = array<i64: 128, 128>}, {transform_indices = @transform_1, window_bounds = array<i64: 128, 128>}, {transform_indices = @transform_2, window_bounds = array<i64: 1, 128>}, {transform_indices = @transform_3, window_bounds = array<i64: 128, 128>}]} {
    %c0 = arith.constant 0 : index
    %c0_0 = arith.constant 0 : index
    %0 = vector.load %arg3[%c0, %c0_0] : memref<128x128xbf16, #tpu.memory_space<vmem>>, vector<128x128xbf16>
    %c0_1 = arith.constant 0 : index
    %c0_2 = arith.constant 0 : index
    %1 = vector.load %arg4[%c0_1, %c0_2] : memref<128x128xbf16, #tpu.memory_space<vmem>>, vector<128x128xbf16>
    %cst = arith.constant dense<0.000000e+00> : vector<128x128xf32>
    %2 = tpu.matmul %0, %1, %cst {dimension_numbers = #tpu.dot_dimension_numbers<[1], [0], [0], [1], [0, 0, 1, 1], [], []>} : vector<128x128xbf16>, vector<128x128xbf16>, vector<128x128xf32> -> vector<128x128xf32>
    %c0_i32 = arith.constant 0 : i32
    %3 = arith.cmpi eq, %arg2, %c0_i32 : i32
    %4 = arith.extui %3 : i1 to i32
    %c0_i32_3 = arith.constant 0 : i32
    %5 = arith.cmpi ne, %4, %c0_i32_3 : i32
    scf.if %5 {
      %c0_8 = arith.constant 0 : index
      %c0_9 = arith.constant 0 : index
      %12 = vector.load %arg7[%c0_8, %c0_9] : memref<128x128xf32, #tpu.memory_space<vmem>>, vector<128x128xf32>
      tpu.vector_store %arg7[%c0_8, %c0_9], %2 {strides = array<i32>} : memref<128x128xf32, #tpu.memory_space<vmem>>, vector<128x128xf32>,
    } else {
    }
    %c0_i32_4 = arith.constant 0 : i32
    %6 = arith.cmpi sgt, %arg2, %c0_i32_4 : i32
    %7 = arith.extui %6 : i1 to i32
    %c0_i32_5 = arith.constant 0 : i32
    %8 = arith.cmpi ne, %7, %c0_i32_5 : i32
    scf.if %8 {
      %c0_8 = arith.constant 0 : index
      %c0_9 = arith.constant 0 : index
      %12 = vector.load %arg7[%c0_8, %c0_9] : memref<128x128xf32, #tpu.memory_space<vmem>>, vector<128x128xf32>
      %13 = arith.addf %12, %2 : vector<128x128xf32>
      %c0_10 = arith.constant 0 : index
      %c0_11 = arith.constant 0 : index
      %14 = vector.load %arg7[%c0_10, %c0_11] : memref<128x128xf32, #tpu.memory_space<vmem>>, vector<128x128xf32>
      tpu.vector_store %arg7[%c0_10, %c0_11], %13 {strides = array<i32>} : memref<128x128xf32, #tpu.memory_space<vmem>>, vector<128x128xf32>,
    } else {
    }
    %c0_i32_6 = arith.constant 0 : i32
    %9 = arith.cmpi eq, %arg2, %c0_i32_6 : i32
    %10 = arith.extui %9 : i1 to i32
    %c0_i32_7 = arith.constant 0 : i32
    %11 = arith.cmpi ne, %10, %c0_i32_7 : i32
    scf.if %11 {
      %c0_8 = arith.constant 0 : index
      %c0_9 = arith.constant 0 : index
      %12 = vector.load %arg7[%c0_8, %c0_9] : memref<128x128xf32, #tpu.memory_space<vmem>>, vector<128x128xf32>
      %c0_10 = arith.constant 0 : index
      %c0_11 = arith.constant 0 : index
      %13 = vector.load %arg5[%c0_10, %c0_11] : memref<1x128xf32, #tpu.memory_space<vmem>>, vector<1x128xf32>
      %14 = vector.broadcast %13 : vector<1x128xf32> to vector<128x128xf32>
      %15 = arith.addf %12, %14 : vector<128x128xf32>
      %cst_12 = arith.constant 2.000000e-01 : f32
      %16 = vector.broadcast %cst_12 : f32 to vector<128x128xf32>
      %17 = arith.mulf %16, %15 : vector<128x128xf32>
      %18 = arith.maximumf %15, %17 : vector<128x128xf32>
      %19 = arith.truncf %18 : vector<128x128xf32> to vector<128x128xbf16>
      %c0_13 = arith.constant 0 : index
      %c0_14 = arith.constant 0 : index
      %20 = vector.load %arg6[%c0_13, %c0_14] : memref<128x128xbf16, #tpu.memory_space<vmem>>, vector<128x128xbf16>
      tpu.vector_store %arg6[%c0_13, %c0_14], %19 {strides = array<i32>} : memref<128x128xbf16, #tpu.memory_space<vmem>>, vector<128x128xbf16>,
    } else {
    }
    return
  }
  func.func @transform_0(%arg0: i32, %arg1: i32, %arg2: i32) -> (i32, i32) {
    %c0_i32 = arith.constant 0 : i32
    return %arg0, %arg2 : i32, i32
  }
  func.func @transform_1(%arg0: i32, %arg1: i32, %arg2: i32) -> (i32, i32) {
    %c0_i32 = arith.constant 0 : i32
    return %arg2, %arg1 : i32, i32
  }
  func.func @transform_2(%arg0: i32, %arg1: i32, %arg2: i32) -> (i32, i32) {
    %c0_i32 = arith.constant 0 : i32
    %c0_i32_0 = arith.constant 0 : i32
    return %c0_i32, %arg1 : i32, i32
  }
  func.func @transform_3(%arg0: i32, %arg1: i32, %arg2: i32) -> (i32, i32) {
    %c0_i32 = arith.constant 0 : i32
    return %arg0, %arg1 : i32, i32
  }
}

</mosaic_0001>

<llo_original>
// kernel: tpu_custom_call.1
$region0: #{tpu_custom_call.1}
  #allocation0 [shape = 'u32[]', space=smem, size = 0x4, offset = 0x4, fixed_abs, tag = 'smem constant byte address 0x4 - core index']
  #allocation1 [shape = 'u32[72,128]{1,0:T(1,128)}', space=vmem, size = 0x9000, scoped, tag = 'internal scratch']
  #allocation2 [shape = 'f32[128,128]{1,0:T(8,128)}', space=vmem, size = 0x10000, scoped, tag = 'scratch operand']
  %s0 = inlined_call_operand.hbm [shape: bf16[128,128], index: 0, kind: input, shape index: {}]
  %s1 = inlined_call_operand.hbm [shape: bf16[128,128], index: 1, kind: input, shape index: {}]
  %s2 = inlined_call_operand.vmem [shape: f32[1,128], index: 2, kind: input, shape index: {}]
  %s3 = inlined_call_operand.hbm [shape: bf16[128,128], index: 3, kind: output, shape index: {}]
  %s4 = sld [smem:[#allocation0]]
  $region42: #{tpu_custom_call.1} parent=0
    _
  %s6 = ssub.s32 1, %s4
  %s7 = scalar_select 0, %s6, %s4
  $region1: #{tpu_custom_call.1} parent=0
    #allocation3 [shape = 'u8[32768]{0}', space=vmem, size = 0x8000, scoped, tag = 'input window, operand 0, single buffered']
    #allocation4 [shape = 's32[1]{0}', space=sflag, size = 0x4, scoped, tag = 'scoped memory for tpu_custom_call.1']
    #allocation5 [shape = 's32[1]{0}', space=sflag, size = 0x4, scoped, tag = 'scoped memory for tpu_custom_call.1']
    #allocation6 [shape = 'u8[32768]{0}', space=vmem, size = 0x8000, scoped, tag = 'input window, operand 1, single buffered']
    #allocation7 [shape = 's32[1]{0}', space=sflag, size = 0x4, scoped, tag = 'scoped memory for tpu_custom_call.1']
    #allocation8 [shape = 'u8[32768]{0}', space=vmem, size = 0x8000, scoped, tag = 'output window, operand 0, single buffered']
    %8 = vsyncpa [#allocation4], 0
    %9 = vsyncpa [#allocation7], 0
    %10 = vsyncpa [#allocation5], 0
    // Predicated region
    $region2: #{tpu_custom_call.1} parent=1 // pred_check
      _
    $region3: #{tpu_custom_call.1} parent=1 // pred_check_branch
      %12 = sbr.rel (0) target = $region5
    $region4: #{tpu_custom_call.1} parent=1 // pred_region
      %14 = vsyncadd [#allocation4], 0
      %s15 = sshll.u32 %s0, 4
      %s16 = int_to_ptr.hbm [resolvable:$true] %s15
      %s17 = sshll.u32 [#allocation3], 4
      %s18 = int_to_ptr.vmem [resolvable:$true] %s17
      %23 = dma.hbm_to_vmem [thread:$0]  %s16, 1024, %s18, [#allocation4], 64, 64, 4
    $region5: #{tpu_custom_call.1} parent=1 // pred_fallthru
      _
    // Predicated region
    $region6: #{tpu_custom_call.1} parent=1 // pred_check
      _
    $region7: #{tpu_custom_call.1} parent=1 // pred_check_branch
      %25 = sbr.rel (0) target = $region9
    $region8: #{tpu_custom_call.1} parent=1 // pred_region
      %27 = vsyncadd [#allocation7], 0
      %s28 = sshll.u32 %s1, 4
      %s29 = int_to_ptr.hbm [resolvable:$true] %s28
      %s30 = sshll.u32 [#allocation6], 4
      %s31 = int_to_ptr.vmem [resolvable:$true] %s30
      %36 = dma.hbm_to_vmem [thread:$0]  %s29, 1024, %s31, [#allocation7], 64, 64, 4
    $region9: #{tpu_custom_call.1} parent=1 // pred_fallthru
      _
    // Predicated region
    $region10: #{tpu_custom_call.1} parent=1 // pred_check
      _
    $region11: #{tpu_custom_call.1} parent=1 // pred_check_branch
      %38 = sbr.rel (0) target = $region13
    $region12: #{tpu_custom_call.1} parent=1 // pred_region
      _
    $region13: #{tpu_custom_call.1} parent=1 // pred_fallthru
      _
    // Predicated region
    $region14: #{tpu_custom_call.1} parent=1 // pred_check
      _
    $region15: #{tpu_custom_call.1} parent=1 // pred_check_branch
      %40 = sbr.rel (0) target = $region17
    $region16: #{tpu_custom_call.1} parent=1 // pred_region
      %42 = dma.done [#allocation4], 1024
    $region17: #{tpu_custom_call.1} parent=1 // pred_fallthru
      _
    // Predicated region
    $region18: #{tpu_custom_call.1} parent=1 // pred_check
      _
    $region19: #{tpu_custom_call.1} parent=1 // pred_check_branch
      %44 = sbr.rel (0) target = $region21
    $region20: #{tpu_custom_call.1} parent=1 // pred_region
      %46 = dma.done [#allocation7], 1024
    $region21: #{tpu_custom_call.1} parent=1 // pred_fallthru
      _
    %v47 = vld [vmem:[#allocation3] sm:$0xf]
    %v48 = vld [vmem:[#allocation3 + $0x4] sm:$0xf]
    %v49 = vld [vmem:[#allocation3 + $0x8] sm:$0xf]
    %v50 = vld [vmem:[#allocation3 + $0xc] sm:$0xf]
    %v51 = vld [vmem:[#allocation3 + $0x10] sm:$0xf]
    %v52 = vld [vmem:[#allocation3 + $0x14] sm:$0xf]
    %v53 = vld [vmem:[#allocation3 + $0x18] sm:$0xf]
    %v54 = vld [vmem:[#allocation3 + $0x1c] sm:$0xf]
    %v55 = vld [vmem:[#allocation3 + $0x20] sm:$0xf]
    %v56 = vld [vmem:[#allocation3 + $0x24] sm:$0xf]
    %v57 = vld [vmem:[#allocation3 + $0x28] sm:$0xf]
    %v58 = vld [vmem:[#allocation3 + $0x2c] sm:$0xf]
    %v59 = vld [vmem:[#allocation3 + $0x30] sm:$0xf]
    %v60 = vld [vmem:[#allocation3 + $0x34] sm:$0xf]
    %v61 = vld [vmem:[#allocation3 + $0x38] sm:$0xf]
    %v62 = vld [vmem:[#allocation3 + $0x3c] sm:$0xf]
    %v63 = vld [vmem:[#allocation6] sm:$0xf]
    %v64 = vld [vmem:[#allocation6 + $0x4] sm:$0xf]
    %v65 = vld [vmem:[#allocation6 + $0x8] sm:$0xf]
    %v66 = vld [vmem:[#allocation6 + $0xc] sm:$0xf]
    %v67 = vld [vmem:[#allocation6 + $0x10] sm:$0xf]
    %v68 = vld [vmem:[#allocation6 + $0x14] sm:$0xf]
    %v69 = vld [vmem:[#allocation6 + $0x18] sm:$0xf]
    %v70 = vld [vmem:[#allocation6 + $0x1c] sm:$0xf]
    %v71 = vld [vmem:[#allocation6 + $0x20] sm:$0xf]
    %v72 = vld [vmem:[#allocation6 + $0x24] sm:$0xf]
    %v73 = vld [vmem:[#allocation6 + $0x28] sm:$0xf]
    %v74 = vld [vmem:[#allocation6 + $0x2c] sm:$0xf]
    %v75 = vld [vmem:[#allocation6 + $0x30] sm:$0xf]
    %v76 = vld [vmem:[#allocation6 + $0x34] sm:$0xf]
    %v77 = vld [vmem:[#allocation6 + $0x38] sm:$0xf]
    %v78 = vld [vmem:[#allocation6 + $0x3c] sm:$0xf]
    %v95 = vunpack.c.l.b16 %v47
    %v96 = vunpack.c.l.b16 %v48
    %v97 = vunpack.c.l.b16 %v49
    %v98 = vunpack.c.l.b16 %v50
    %v99 = vunpack.c.l.b16 %v51
    %v100 = vunpack.c.l.b16 %v52
    %v101 = vunpack.c.l.b16 %v53
    %v102 = vunpack.c.l.b16 %v54
    %v103 = vunpack.c.l.b16 %v55
    %v104 = vunpack.c.l.b16 %v56
    %v105 = vunpack.c.l.b16 %v57
    %v106 = vunpack.c.l.b16 %v58
    %v107 = vunpack.c.l.b16 %v59
    %v108 = vunpack.c.l.b16 %v60
    %v109 = vunpack.c.l.b16 %v61
    %v110 = vunpack.c.l.b16 %v62
    %v111 = vpack.c.b16 %v96, %v95
    %v112 = vpack.c.b16 %v98, %v97
    %v113 = vpack.c.b16 %v100, %v99
    %v114 = vpack.c.b16 %v102, %v101
    %v115 = vpack.c.b16 %v104, %v103
    %v116 = vpack.c.b16 %v106, %v105
    %v117 = vpack.c.b16 %v108, %v107
    %v118 = vpack.c.b16 %v110, %v109
    %v143 = vunpack.c.l.b16 %v63
    %v144 = vunpack.c.l.b16 %v64
    %v145 = vunpack.c.l.b16 %v65
    %v146 = vunpack.c.l.b16 %v66
    %v147 = vunpack.c.l.b16 %v67
    %v148 = vunpack.c.l.b16 %v68
    %v149 = vunpack.c.l.b16 %v69
    %v150 = vunpack.c.l.b16 %v70
    %v151 = vunpack.c.l.b16 %v71
    %v152 = vunpack.c.l.b16 %v72
    %v153 = vunpack.c.l.b16 %v73
    %v154 = vunpack.c.l.b16 %v74
    %v155 = vunpack.c.l.b16 %v75
    %v156 = vunpack.c.l.b16 %v76
    %v157 = vunpack.c.l.b16 %v77
    %v158 = vunpack.c.l.b16 %v78
    %v159 = vpack.c.b16 %v144, %v143
    %v160 = vpack.c.b16 %v146, %v145
    %v161 = vpack.c.b16 %v148, %v147
    %v162 = vpack.c.b16 %v150, %v149
    %v163 = vpack.c.b16 %v152, %v151
    %v164 = vpack.c.b16 %v154, %v153
    %v165 = vpack.c.b16 %v156, %v155
    %v166 = vpack.c.b16 %v158, %v157
    %175 = vmatpush.bf16.msra.mxu0 %v166
    %176 = vmatpush.bf16.msra.mxu0 %v165
    %177 = vmatpush.bf16.msra.mxu0 %v164
    %178 = vmatpush.bf16.msra.mxu0 %v163
    %179 = vmatpush.bf16.msra.mxu0 %v162
    %180 = vmatpush.bf16.msra.mxu0 %v161
    %181 = vmatpush.bf16.msra.mxu0 %v160
    %182 = vmatpush.bf16.msra.mxu0 %v159
    %183 = vmatmul.bf16.gmra.mxu0 %v111
    %v184 = vpop.f32.mrf.mxu0
    %v185 = vadd.f32 0.0, %v184
    %v186 = vpop.f32.mrf.mxu0
    %v187 = vadd.f32 0.0, %v186
    %188 = vmatmul.bf16.gmra.mxu0 %v112
    %v189 = vpop.f32.mrf.mxu0
    %v190 = vadd.f32 0.0, %v189
    %v191 = vpop.f32.mrf.mxu0
    %v192 = vadd.f32 0.0, %v191
    %193 = vmatmul.bf16.gmra.mxu0 %v113
    %v194 = vpop.f32.mrf.mxu0
    %v195 = vadd.f32 0.0, %v194
    %v196 = vpop.f32.mrf.mxu0
    %v197 = vadd.f32 0.0, %v196
    %198 = vmatmul.bf16.gmra.mxu0 %v114
    %v199 = vpop.f32.mrf.mxu0
    %v200 = vadd.f32 0.0, %v199
    %v201 = vpop.f32.mrf.mxu0
    %v202 = vadd.f32 0.0, %v201
    %203 = vmatmul.bf16.gmra.mxu0 %v115
    %v204 = vpop.f32.mrf.mxu0
    %v205 = vadd.f32 0.0, %v204
    %v206 = vpop.f32.mrf.mxu0
    %v207 = vadd.f32 0.0, %v206
    %208 = vmatmul.bf16.gmra.mxu0 %v116
    %v209 = vpop.f32.mrf.mxu0
    %v210 = vadd.f32 0.0, %v209
    %v211 = vpop.f32.mrf.mxu0
    %v212 = vadd.f32 0.0, %v211
    %213 = vmatmul.bf16.gmra.mxu0 %v117
    %v214 = vpop.f32.mrf.mxu0
    %v215 = vadd.f32 0.0, %v214
    %v216 = vpop.f32.mrf.mxu0
    %v217 = vadd.f32 0.0, %v216
    %218 = vmatmul.bf16.gmra.mxu0 %v118
    %v219 = vpop.f32.mrf.mxu0
    %v220 = vadd.f32 0.0, %v219
    %v221 = vpop.f32.mrf.mxu0
    %v222 = vadd.f32 0.0, %v221
    %223 = vdwg.mxu0
    %p224 = scmp.eq.s32.totalorder 0, 0
    // Predicated region
    $region22: #{tpu_custom_call.1} parent=1 // pred_check
      %p225 = pneg %p224
    $region23: #{tpu_custom_call.1} parent=1 // pred_check_branch
      %227 = sbr.rel (%p225) target = $region25
    $region24: #{tpu_custom_call.1} parent=1 // pred_region
      %228 = vst [vmem:[#allocation2] sm:$0xff] %v185
      %229 = vst [vmem:[#allocation2 + $0x8] sm:$0xff] %v187
      %230 = vst [vmem:[#allocation2 + $0x10] sm:$0xff] %v190
      %231 = vst [vmem:[#allocation2 + $0x18] sm:$0xff] %v192
      %232 = vst [vmem:[#allocation2 + $0x20] sm:$0xff] %v195
      %233 = vst [vmem:[#allocation2 + $0x28] sm:$0xff] %v197
      %234 = vst [vmem:[#allocation2 + $0x30] sm:$0xff] %v200
      %235 = vst [vmem:[#allocation2 + $0x38] sm:$0xff] %v202
      %236 = vst [vmem:[#allocation2 + $0x40] sm:$0xff] %v205
      %237 = vst [vmem:[#allocation2 + $0x48] sm:$0xff] %v207
      %238 = vst [vmem:[#allocation2 + $0x50] sm:$0xff] %v210
      %239 = vst [vmem:[#allocation2 + $0x58] sm:$0xff] %v212
      %240 = vst [vmem:[#allocation2 + $0x60] sm:$0xff] %v215
      %241 = vst [vmem:[#allocation2 + $0x68] sm:$0xff] %v217
      %242 = vst [vmem:[#allocation2 + $0x70] sm:$0xff] %v220
      %243 = vst [vmem:[#allocation2 + $0x78] sm:$0xff] %v222
    $region25: #{tpu_custom_call.1} parent=1 // pred_fallthru
      _
    %p244 = scmp.gt.s32.totalorder 0, 0
    // Predicated region
    $region26: #{tpu_custom_call.1} parent=1 // pred_check
      %p245 = pneg %p244
    $region27: #{tpu_custom_call.1} parent=1 // pred_check_branch
      %247 = sbr.rel (%p245) target = $region29
    $region28: #{tpu_custom_call.1} parent=1 // pred_region
      %v248 = vld [vmem:[#allocation2] sm:$0xff]
      %v249 = vld [vmem:[#allocation2 + $0x8] sm:$0xff]
      %v250 = vld [vmem:[#allocation2 + $0x10] sm:$0xff]
      %v251 = vld [vmem:[#allocation2 + $0x18] sm:$0xff]
      %v252 = vld [vmem:[#allocation2 + $0x20] sm:$0xff]
      %v253 = vld [vmem:[#allocation2 + $0x28] sm:$0xff]
      %v254 = vld [vmem:[#allocation2 + $0x30] sm:$0xff]
      %v255 = vld [vmem:[#allocation2 + $0x38] sm:$0xff]
      %v256 = vld [vmem:[#allocation2 + $0x40] sm:$0xff]
      %v257 = vld [vmem:[#allocation2 + $0x48] sm:$0xff]
      %v258 = vld [vmem:[#allocation2 + $0x50] sm:$0xff]
      %v259 = vld [vmem:[#allocation2 + $0x58] sm:$0xff]
      %v260 = vld [vmem:[#allocation2 + $0x60] sm:$0xff]
      %v261 = vld [vmem:[#allocation2 + $0x68] sm:$0xff]
      %v262 = vld [vmem:[#allocation2 + $0x70] sm:$0xff]
      %v263 = vld [vmem:[#allocation2 + $0x78] sm:$0xff]
      %v264 = vadd.f32 %v248, %v185
      %v265 = vadd.f32 %v249, %v187
      %v266 = vadd.f32 %v250, %v190
      %v267 = vadd.f32 %v251, %v192
      %v268 = vadd.f32 %v252, %v195
      %v269 = vadd.f32 %v253, %v197
      %v270 = vadd.f32 %v254, %v200
      %v271 = vadd.f32 %v255, %v202
      %v272 = vadd.f32 %v256, %v205
      %v273 = vadd.f32 %v257, %v207
      %v274 = vadd.f32 %v258, %v210
      %v275 = vadd.f32 %v259, %v212
      %v276 = vadd.f32 %v260, %v215
      %v277 = vadd.f32 %v261, %v217
      %v278 = vadd.f32 %v262, %v220
      %v279 = vadd.f32 %v263, %v222
      %280 = vst [vmem:[#allocation2] sm:$0xff] %v264
      %281 = vst [vmem:[#allocation2 + $0x8] sm:$0xff] %v265
      %282 = vst [vmem:[#allocation2 + $0x10] sm:$0xff] %v266
      %283 = vst [vmem:[#allocation2 + $0x18] sm:$0xff] %v267
      %284 = vst [vmem:[#allocation2 + $0x20] sm:$0xff] %v268
      %285 = vst [vmem:[#allocation2 + $0x28] sm:$0xff] %v269
      %286 = vst [vmem:[#allocation2 + $0x30] sm:$0xff] %v270
      %287 = vst [vmem:[#allocation2 + $0x38] sm:$0xff] %v271
      %288 = vst [vmem:[#allocation2 + $0x40] sm:$0xff] %v272
      %289 = vst [vmem:[#allocation2 + $0x48] sm:$0xff] %v273
      %290 = vst [vmem:[#allocation2 + $0x50] sm:$0xff] %v274
      %291 = vst [vmem:[#allocation2 + $0x58] sm:$0xff] %v275
      %292 = vst [vmem:[#allocation2 + $0x60] sm:$0xff] %v276
      %293 = vst [vmem:[#allocation2 + $0x68] sm:$0xff] %v277
      %294 = vst [vmem:[#allocation2 + $0x70] sm:$0xff] %v278
      %295 = vst [vmem:[#allocation2 + $0x78] sm:$0xff] %v279
    $region29: #{tpu_custom_call.1} parent=1 // pred_fallthru
      _
    // Predicated region
    $region30: #{tpu_custom_call.1} parent=1 // pred_check
      %p296 = pneg %p224
    $region31: #{tpu_custom_call.1} parent=1 // pred_check_branch
      %298 = sbr.rel (%p296) target = $region33
    $region32: #{tpu_custom_call.1} parent=1 // pred_region
      %v299 = vld [vmem:[#allocation2] sm:$0xff]
      %v300 = vld [vmem:[#allocation2 + $0x8] sm:$0xff]
      %v301 = vld [vmem:[#allocation2 + $0x10] sm:$0xff]
      %v302 = vld [vmem:[#allocation2 + $0x18] sm:$0xff]
      %v303 = vld [vmem:[#allocation2 + $0x20] sm:$0xff]
      %v304 = vld [vmem:[#allocation2 + $0x28] sm:$0xff]
      %v305 = vld [vmem:[#allocation2 + $0x30] sm:$0xff]
      %v306 = vld [vmem:[#allocation2 + $0x38] sm:$0xff]
      %v307 = vld [vmem:[#allocation2 + $0x40] sm:$0xff]
      %v308 = vld [vmem:[#allocation2 + $0x48] sm:$0xff]
      %v309 = vld [vmem:[#allocation2 + $0x50] sm:$0xff]
      %v310 = vld [vmem:[#allocation2 + $0x58] sm:$0xff]
      %v311 = vld [vmem:[#allocation2 + $0x60] sm:$0xff]
      %v312 = vld [vmem:[#allocation2 + $0x68] sm:$0xff]
      %v313 = vld [vmem:[#allocation2 + $0x70] sm:$0xff]
      %v314 = vld [vmem:[#allocation2 + $0x78] sm:$0xff]
      %v315 = vld [vmem:[%s2] sm:$0x1]
      %v317 = vperm.slane %v315, 0
      %v319 = vadd.f32 %v299, %v317
      %v320 = vadd.f32 %v300, %v317
      %v321 = vadd.f32 %v301, %v317
      %v322 = vadd.f32 %v302, %v317
      %v323 = vadd.f32 %v303, %v317
      %v324 = vadd.f32 %v304, %v317
      %v325 = vadd.f32 %v305, %v317
      %v326 = vadd.f32 %v306, %v317
      %v327 = vadd.f32 %v307, %v317
      %v328 = vadd.f32 %v308, %v317
      %v329 = vadd.f32 %v309, %v317
      %v330 = vadd.f32 %v310, %v317
      %v331 = vadd.f32 %v311, %v317
      %v332 = vadd.f32 %v312, %v317
      %v333 = vadd.f32 %v313, %v317
      %v334 = vadd.f32 %v314, %v317
      %v335 = vmul.f32 %v319, 0.2
      %v336 = vmul.f32 %v320, 0.2
      %v337 = vmul.f32 %v321, 0.2
      %v338 = vmul.f32 %v322, 0.2
      %v339 = vmul.f32 %v323, 0.2
      %v340 = vmul.f32 %v324, 0.2
      %v341 = vmul.f32 %v325, 0.2
      %v342 = vmul.f32 %v326, 0.2
      %v343 = vmul.f32 %v327, 0.2
      %v344 = vmul.f32 %v328, 0.2
      %v345 = vmul.f32 %v329, 0.2
      %v346 = vmul.f32 %v330, 0.2
      %v347 = vmul.f32 %v331, 0.2
      %v348 = vmul.f32 %v332, 0.2
      %v349 = vmul.f32 %v333, 0.2
      %v350 = vmul.f32 %v334, 0.2
      %v351 = vmax.f32 %v319, %v335
      %v352 = vmax.f32 %v320, %v336
      %v353 = vmax.f32 %v321, %v337
      %v354 = vmax.f32 %v322, %v338
      %v355 = vmax.f32 %v323, %v339
      %v356 = vmax.f32 %v324, %v340
      %v357 = vmax.f32 %v325, %v341
      %v358 = vmax.f32 %v326, %v342
      %v359 = vmax.f32 %v327, %v343
      %v360 = vmax.f32 %v328, %v344
      %v361 = vmax.f32 %v329, %v345
      %v362 = vmax.f32 %v330, %v346
      %v363 = vmax.f32 %v331, %v347
      %v364 = vmax.f32 %v332, %v348
      %v365 = vmax.f32 %v333, %v349
      %v366 = vmax.f32 %v334, %v350
      %v367 = vpack.c.bf16 %v351, %v351
      %v368 = vpack.c.bf16 %v352, %v352
      %v369 = vpack.c.bf16 %v353, %v353
      %v370 = vpack.c.bf16 %v354, %v354
      %v371 = vpack.c.bf16 %v355, %v355
      %v372 = vpack.c.bf16 %v356, %v356
      %v373 = vpack.c.bf16 %v357, %v357
      %v374 = vpack.c.bf16 %v358, %v358
      %v375 = vpack.c.bf16 %v359, %v359
      %v376 = vpack.c.bf16 %v360, %v360
      %v377 = vpack.c.bf16 %v361, %v361
      %v378 = vpack.c.bf16 %v362, %v362
      %v379 = vpack.c.bf16 %v363, %v363
      %v380 = vpack.c.bf16 %v364, %v364
      %v381 = vpack.c.bf16 %v365, %v365
      %v382 = vpack.c.bf16 %v366, %v366
      %383 = vst [vmem:[#allocation8] sm:$0xf] %v367
      %384 = vst [vmem:[#allocation8 + $0x4] sm:$0xf] %v368
      %385 = vst [vmem:[#allocation8 + $0x8] sm:$0xf] %v369
      %386 = vst [vmem:[#allocation8 + $0xc] sm:$0xf] %v370
      %387 = vst [vmem:[#allocation8 + $0x10] sm:$0xf] %v371
      %388 = vst [vmem:[#allocation8 + $0x14] sm:$0xf] %v372
      %389 = vst [vmem:[#allocation8 + $0x18] sm:$0xf] %v373
      %390 = vst [vmem:[#allocation8 + $0x1c] sm:$0xf] %v374
      %391 = vst [vmem:[#allocation8 + $0x20] sm:$0xf] %v375
      %392 = vst [vmem:[#allocation8 + $0x24] sm:$0xf] %v376
      %393 = vst [vmem:[#allocation8 + $0x28] sm:$0xf] %v377
      %394 = vst [vmem:[#allocation8 + $0x2c] sm:$0xf] %v378
      %395 = vst [vmem:[#allocation8 + $0x30] sm:$0xf] %v379
      %396 = vst [vmem:[#allocation8 + $0x34] sm:$0xf] %v380
      %397 = vst [vmem:[#allocation8 + $0x38] sm:$0xf] %v381
      %398 = vst [vmem:[#allocation8 + $0x3c] sm:$0xf] %v382
    $region33: #{tpu_custom_call.1} parent=1 // pred_fallthru
      _
    // Predicated region
    $region34: #{tpu_custom_call.1} parent=1 // pred_check
      _
    $region35: #{tpu_custom_call.1} parent=1 // pred_check_branch
      %400 = sbr.rel (0) target = $region37
    $region36: #{tpu_custom_call.1} parent=1 // pred_region
      %402 = vsyncadd [#allocation5], 0
      %s403 = sshll.u32 [#allocation8], 4
      %s404 = int_to_ptr.vmem [resolvable:$true] %s403
      %s405 = sshll.u32 %s3, 4
      %s406 = int_to_ptr.hbm [resolvable:$true] %s405
      %411 = dma.vmem_to_hbm [thread:$0]  %s404, 1024, %s406, [#allocation5], 64, 64, 4
    $region37: #{tpu_custom_call.1} parent=1 // pred_fallthru
      _
    // Predicated region
    $region38: #{tpu_custom_call.1} parent=1 // pred_check
      _
    $region39: #{tpu_custom_call.1} parent=1 // pred_check_branch
      %413 = sbr.rel (0) target = $region41
    $region40: #{tpu_custom_call.1} parent=1 // pred_region
      %415 = dma.done [#allocation5], 1024
    $region41: #{tpu_custom_call.1} parent=1 // pred_fallthru
      _
    %416 = vsyncpa [#allocation4], 1
    %417 = vsyncpa [#allocation7], 1
    %418 = vsyncpa [#allocation5], 1

</llo_original>
